<compile_context>
chip_gen: v6e
topology: v6e:2x2x1
jax: 0.10.0
libtpu: 0.0.40
codegen_flags: <defaults>
</compile_context>

<pallas_src>
import math

import jax
import jax.numpy as jnp
from jax.experimental import pallas as pl
from jax.experimental.pallas import tpu as pltpu


def _palayer_kernel(x_ref, y_ref, z_ref, w1_ref, b1_ref, w2_ref, b2_ref, o_ref):
    # x/y/z blocks: (TB, C, HW); w1: (C1, C); b1: (C1, 1); w2: (C1, 1) column;
    # b2: (1, 1) scalar in SMEM; o: (TB, 1, HW).
    tb, _, hw = x_ref.shape
    w1 = w1_ref[...]
    b1 = b1_ref[...]
    w2 = w2_ref[...]              # (C1, 1)
    b2 = b2_ref[0, 0]             # scalar from SMEM

    for b in range(tb):           # static, unrolled loop over batch elems in this block
        # Lay the three inputs side by side in the lane axis: (C, 3*HW).
        xyz = jnp.concatenate([x_ref[b], y_ref[b], z_ref[b]], axis=-1)

        # conv1 (1x1) == channel matmul: one (C1, C) @ (C, 3*HW) MXU pass for all
        # three pa() branches, then bias + ReLU on the VPU.
        h = jnp.dot(w1, xyz, preferred_element_type=jnp.float32) + b1
        h = jnp.maximum(h, 0.0)

        # conv2 (1x1, out_ch = 1): broadcast multiply + sublane reduce (VPU/XLU)
        # instead of a latency-bound (1, C1) MXU matmul.
        s = jnp.sum(h * w2, axis=0, keepdims=True) + b2      # (1, 3*HW)
        g = jax.nn.sigmoid(s)                                 # (1, 3*HW)

        # pa(x) * pa(y) * pa(z): split the fused slab back into thirds.
        out = g[:, 0:hw] * g[:, hw:2 * hw] * g[:, 2 * hw:3 * hw]   # (1, HW)
        o_ref[b] = out


def palayer_forward(x, y, z, params):
    """x, y, z: (B, C, H, W). params = (w1 (C1,C), b1 (C1,), w2 (1,C1), b2 (1,))."""
    w1, b1, w2, b2 = params
    B, C, H, W = x.shape
    HW = H * W
    C1 = w1.shape[0]

    # At most two grid steps: one large batch block per v7x TensorCore; on
    # v5e/v6e (single TC) this just means big blocks and negligible per-step
    # overhead. For B not divisible by 2, fall back to a single block.
    num_steps = 2 if (B >= 2 and B % 2 == 0) else 1
    TB = B // num_steps

    xf = x.reshape(B, C, HW)
    yf = y.reshape(B, C, HW)
    zf = z.reshape(B, C, HW)

    out = pl.pallas_call(
        _palayer_kernel,
        out_shape=jax.ShapeDtypeStruct((B, 1, HW), jnp.float32),
        grid=(num_steps,),
        in_specs=[
            pl.BlockSpec((TB, C, HW), lambda i: (i, 0, 0)),
            pl.BlockSpec((TB, C, HW), lambda i: (i, 0, 0)),
            pl.BlockSpec((TB, C, HW), lambda i: (i, 0, 0)),
            pl.BlockSpec((C1, C), lambda i: (0, 0)),   # weights resident across grid
            pl.BlockSpec((C1, 1), lambda i: (0, 0)),
            pl.BlockSpec((C1, 1), lambda i: (0, 0)),
            pl.BlockSpec(memory_space=pltpu.MemorySpace.SMEM),   # b2 scalar
        ],
        out_specs=pl.BlockSpec((TB, 1, HW), lambda i: (i, 0, 0)),
        compiler_params=pltpu.CompilerParams(
            dimension_semantics=("parallel",)),
    )(xf, yf, zf, w1, b1.reshape(C1, 1), w2.reshape(C1, 1), b2.reshape(1, 1))

    return out.reshape(B, 1, H, W)


def _palayer_ref(x, y, z, params):
    """Pure-JAX reference mirroring the PyTorch module, for correctness check."""
    w1, b1, w2, b2 = params

    def pa(t):
        B, C, H, W = t.shape
        tf = t.reshape(B, C, H * W)
        h = jnp.einsum('oc,bcp->bop', w1, tf) + b1[None, :, None]
        h = jnp.maximum(h, 0.0)
        s = jnp.einsum('oc,bcp->bop', w2, h) + b2[None, :, None]
        return jax.nn.sigmoid(s).reshape(B, 1, H, W)

    return pa(x) * pa(y) * pa(z)


if __name__ == "__main__":
    key = jax.random.PRNGKey(0)
    kx, ky, kz, kw1, kb1, kw2, kb2 = jax.random.split(key, 7)

    B, C, H, W = 2, 32, 16, 16
    reduction = 8
    C1 = C // reduction

    x = jax.random.normal(kx, (B, C, H, W), jnp.float32)
    y = jax.random.normal(ky, (B, C, H, W), jnp.float32)
    z = jax.random.normal(kz, (B, C, H, W), jnp.float32)

    # Deterministic parameter init (PyTorch-style uniform bounds for 1x1 convs);
    # weights are stored as (out_ch, in_ch), i.e. the 1x1 conv kernels squeezed.
    bnd1 = 1.0 / math.sqrt(C)
    w1 = jax.random.uniform(kw1, (C1, C), jnp.float32, -bnd1, bnd1)
    b1 = jax.random.uniform(kb1, (C1,), jnp.float32, -bnd1, bnd1)
    bnd2 = 1.0 / math.sqrt(C1)
    w2 = jax.random.uniform(kw2, (1, C1), jnp.float32, -bnd2, bnd2)
    b2 = jax.random.uniform(kb2, (1,), jnp.float32, -bnd2, bnd2)

    params = (w1, b1, w2, b2)

    out = palayer_forward(x, y, z, params)
    jax.block_until_ready(out)

    ref = _palayer_ref(x, y, z, params)
    assert out.shape == (B, 1, H, W) and out.dtype == jnp.float32
    assert jnp.allclose(out, ref, rtol=1e-5, atol=1e-5), "mismatch vs JAX reference"
    print("KERNEL_OK")
</pallas_src>

<mosaic_0001>
module attributes {stable_mosaic.version = 11 : i64} {
  func.func @_palayer_kernel(%arg0: i32, %arg1: memref<1x32x256xf32, #tpu.memory_space<vmem>>, %arg2: memref<1x32x256xf32, #tpu.memory_space<vmem>>, %arg3: memref<1x32x256xf32, #tpu.memory_space<vmem>>, %arg4: memref<4x32xf32, #tpu.memory_space<vmem>>, %arg5: memref<4x1xf32, #tpu.memory_space<vmem>>, %arg6: memref<4x1xf32, #tpu.memory_space<vmem>>, %arg7: memref<1x1xf32, #tpu.memory_space<smem>>, %arg8: memref<1x1x256xf32, #tpu.memory_space<vmem>>) attributes {dimension_semantics = [#tpu.dimension_semantics<parallel>], iteration_bounds = array<i64: 2>, scalar_prefetch = 0 : i64, scratch_operands = 0 : i64, tpu.core_type = #tpu.core_type<tc>, window_params = [{transform_indices = @transform_0, window_bounds = array<i64: 1, 32, 256>}, {transform_indices = @transform_1, window_bounds = array<i64: 1, 32, 256>}, {transform_indices = @transform_2, window_bounds = array<i64: 1, 32, 256>}, {pipeline_mode = #tpu.pipeline_mode<synchronous>, transform_indices = @transform_3, window_bounds = array<i64: 4, 32>}, {pipeline_mode = #tpu.pipeline_mode<synchronous>, transform_indices = @transform_4, window_bounds = array<i64: 4, 1>}, {pipeline_mode = #tpu.pipeline_mode<synchronous>, transform_indices = @transform_5, window_bounds = array<i64: 4, 1>}, {transform_indices = @transform_6, window_bounds = array<i64: 1, 1>}, {transform_indices = @transform_7, window_bounds = array<i64: 1, 1, 256>}]} {
    %c0 = arith.constant 0 : index
    %c0_0 = arith.constant 0 : index
    %0 = vector.load %arg4[%c0, %c0_0] : memref<4x32xf32, #tpu.memory_space<vmem>>, vector<4x32xf32>
    %c0_1 = arith.constant 0 : index
    %c0_2 = arith.constant 0 : index
    %1 = vector.load %arg5[%c0_1, %c0_2] : memref<4x1xf32, #tpu.memory_space<vmem>>, vector<4x1xf32>
    %c0_3 = arith.constant 0 : index
    %c0_4 = arith.constant 0 : index
    %2 = vector.load %arg6[%c0_3, %c0_4] : memref<4x1xf32, #tpu.memory_space<vmem>>, vector<4x1xf32>
    %c0_5 = arith.constant 0 : index
    %c0_6 = arith.constant 0 : index
    %3 = memref.load %arg7[%c0_5, %c0_6] : memref<1x1xf32, #tpu.memory_space<smem>>
    %c0_7 = arith.constant 0 : index
    %c0_8 = arith.constant 0 : index
    %c0_9 = arith.constant 0 : index
    %4 = vector.load %arg1[%c0_7, %c0_8, %c0_9] : memref<1x32x256xf32, #tpu.memory_space<vmem>>, vector<1x32x256xf32>
    %5 = vector.shape_cast %4 : vector<1x32x256xf32> to vector<32x256xf32>
    %c0_10 = arith.constant 0 : index
    %c0_11 = arith.constant 0 : index
    %c0_12 = arith.constant 0 : index
    %6 = vector.load %arg2[%c0_10, %c0_11, %c0_12] : memref<1x32x256xf32, #tpu.memory_space<vmem>>, vector<1x32x256xf32>
    %7 = vector.shape_cast %6 : vector<1x32x256xf32> to vector<32x256xf32>
    %c0_13 = arith.constant 0 : index
    %c0_14 = arith.constant 0 : index
    %c0_15 = arith.constant 0 : index
    %8 = vector.load %arg3[%c0_13, %c0_14, %c0_15] : memref<1x32x256xf32, #tpu.memory_space<vmem>>, vector<1x32x256xf32>
    %9 = vector.shape_cast %8 : vector<1x32x256xf32> to vector<32x256xf32>
    %10 = tpu.concatenate %5, %7, %9 in 1 : vector<32x256xf32>, vector<32x256xf32>, vector<32x256xf32> -> vector<32x768xf32>
    %cst = arith.constant dense<0.000000e+00> : vector<4x768xf32>
    %11 = tpu.matmul %0, %10, %cst {dimension_numbers = #tpu.dot_dimension_numbers<[1], [0], [0], [1], [0, 0, 1, 1], [], []>} : vector<4x32xf32>, vector<32x768xf32>, vector<4x768xf32> -> vector<4x768xf32>
    %12 = vector.broadcast %1 : vector<4x1xf32> to vector<4x768xf32>
    %13 = arith.addf %11, %12 : vector<4x768xf32>
    %cst_16 = arith.constant 0.000000e+00 : f32
    %14 = vector.broadcast %cst_16 : f32 to vector<4x768xf32>
    %15 = arith.maximumf %13, %14 : vector<4x768xf32>
    %16 = vector.broadcast %2 : vector<4x1xf32> to vector<4x768xf32>
    %17 = arith.mulf %15, %16 : vector<4x768xf32>
    %cst_17 = arith.constant dense<0.000000e+00> : vector<768xf32>
    %18 = vector.multi_reduction <add>, %17, %cst_17 [0] : vector<4x768xf32> to vector<768xf32>
    %19 = vector.shape_cast %18 : vector<768xf32> to vector<1x768xf32>
    %20 = vector.broadcast %3 : f32 to vector<1x768xf32>
    %21 = arith.addf %19, %20 : vector<1x768xf32>
    %22 = arith.negf %21 : vector<1x768xf32>
    %23 = math.exp %22 : vector<1x768xf32>
    %cst_18 = arith.constant 1.000000e+00 : f32
    %24 = vector.broadcast %cst_18 : f32 to vector<1x768xf32>
    %25 = arith.addf %24, %23 : vector<1x768xf32>
    %26 = arith.divf %24, %25 : vector<1x768xf32>
    %27 = vector.extract_strided_slice %26 {offsets = [0, 0], sizes = [1, 256], strides = [1, 1]} : vector<1x768xf32> to vector<1x256xf32>
    %28 = vector.extract_strided_slice %26 {offsets = [0, 256], sizes = [1, 256], strides = [1, 1]} : vector<1x768xf32> to vector<1x256xf32>
    %29 = arith.mulf %27, %28 : vector<1x256xf32>
    %30 = vector.extract_strided_slice %26 {offsets = [0, 512], sizes = [1, 256], strides = [1, 1]} : vector<1x768xf32> to vector<1x256xf32>
    %31 = arith.mulf %29, %30 : vector<1x256xf32>
    %c0_19 = arith.constant 0 : index
    %c0_20 = arith.constant 0 : index
    %c0_21 = arith.constant 0 : index
    %32 = vector.load %arg8[%c0_19, %c0_20, %c0_21] : memref<1x1x256xf32, #tpu.memory_space<vmem>>, vector<1x1x256xf32>
    %33 = vector.shape_cast %32 : vector<1x1x256xf32> to vector<1x256xf32>
    %34 = vector.shape_cast %31 : vector<1x256xf32> to vector<1x1x256xf32>
    tpu.vector_store %arg8[%c0_19, %c0_20, %c0_21], %34 {strides = array<i32>} : memref<1x1x256xf32, #tpu.memory_space<vmem>>, vector<1x1x256xf32>,
    return
  }
  func.func @transform_0(%arg0: i32) -> (i32, i32, i32) {
    %c0_i32 = arith.constant 0 : i32
    %c0_i32_0 = arith.constant 0 : i32
    %c0_i32_1 = arith.constant 0 : i32
    return %arg0, %c0_i32, %c0_i32_0 : i32, i32, i32
  }
  func.func @transform_1(%arg0: i32) -> (i32, i32, i32) {
    %c0_i32 = arith.constant 0 : i32
    %c0_i32_0 = arith.constant 0 : i32
    %c0_i32_1 = arith.constant 0 : i32
    return %arg0, %c0_i32, %c0_i32_0 : i32, i32, i32
  }
  func.func @transform_2(%arg0: i32) -> (i32, i32, i32) {
    %c0_i32 = arith.constant 0 : i32
    %c0_i32_0 = arith.constant 0 : i32
    %c0_i32_1 = arith.constant 0 : i32
    return %arg0, %c0_i32, %c0_i32_0 : i32, i32, i32
  }
  func.func @transform_3(%arg0: i32) -> (i32, i32) {
    %c0_i32 = arith.constant 0 : i32
    %c0_i32_0 = arith.constant 0 : i32
    %c0_i32_1 = arith.constant 0 : i32
    return %c0_i32, %c0_i32_0 : i32, i32
  }
  func.func @transform_4(%arg0: i32) -> (i32, i32) {
    %c0_i32 = arith.constant 0 : i32
    %c0_i32_0 = arith.constant 0 : i32
    %c0_i32_1 = arith.constant 0 : i32
    return %c0_i32, %c0_i32_0 : i32, i32
  }
  func.func @transform_5(%arg0: i32) -> (i32, i32) {
    %c0_i32 = arith.constant 0 : i32
    %c0_i32_0 = arith.constant 0 : i32
    %c0_i32_1 = arith.constant 0 : i32
    return %c0_i32, %c0_i32_0 : i32, i32
  }
  func.func @transform_6(%arg0: i32) -> (i32, i32) {
    %c0_i32 = arith.constant 0 : i32
    %c0_i32_0 = arith.constant 0 : i32
    %c0_i32_1 = arith.constant 0 : i32
    return %c0_i32, %c0_i32_0 : i32, i32
  }
  func.func @transform_7(%arg0: i32) -> (i32, i32, i32) {
    %c0_i32 = arith.constant 0 : i32
    %c0_i32_0 = arith.constant 0 : i32
    %c0_i32_1 = arith.constant 0 : i32
    return %arg0, %c0_i32, %c0_i32_0 : i32, i32, i32
  }
}

</mosaic_0001>

<llo_original>
// kernel: tpu_custom_call.1
$region0: #{tpu_custom_call.1}
  #allocation0 [shape = 'u32[]', space=smem, size = 0x4, offset = 0x4, fixed_abs, tag = 'smem constant byte address 0x4 - core index']
  #allocation1 [shape = 'u32[144,128]{1,0:T(1,128)}', space=vmem, size = 0x12000, scoped, tag = 'internal scratch']
  #allocation2 [shape = 'f32[1,1]{1,0:T(1,128)S(6)}', space=smem, size = 0x200, scoped, tag = 'scoped memory for tpu_custom_call.1']
  %s0 = inlined_call_operand.hbm [shape: f32[2,32,256], index: 0, kind: input, shape index: {}]
  %s1 = inlined_call_operand.hbm [shape: f32[2,32,256], index: 1, kind: input, shape index: {}]
  %s2 = inlined_call_operand.hbm [shape: f32[2,32,256], index: 2, kind: input, shape index: {}]
  %s3 = inlined_call_operand.vmem [shape: f32[4,32], index: 3, kind: input, shape index: {}]
  %s4 = inlined_call_operand.vmem [shape: f32[4,1], index: 4, kind: input, shape index: {}]
  %s5 = inlined_call_operand.vmem [shape: f32[4,1], index: 5, kind: input, shape index: {}]
  %s6 = inlined_call_operand.<no memory space> [shape: f32[1,1], index: 6, kind: input, shape index: {}]
  %s7 = inlined_call_operand.hbm [shape: f32[2,1,256], index: 7, kind: output, shape index: {}]
  %s8 = sld [smem:[#allocation0]]
  $region73: #{tpu_custom_call.1} parent=0
    _
  %s10 = ssub.s32 1, %s8
  %s11 = scalar_select 0, %s10, %s8
  %12 = sst [smem:[#allocation2]] %s6
  $region1: #{tpu_custom_call.1} parent=0
    #allocation3 [shape = 'u8[65536]{0}', space=vmem, size = 0x10000, scoped, tag = 'input window, operand 0']
    #allocation4 [shape = 's32[2]{0}', space=sflag, size = 0x8, scoped, tag = 'scoped memory for tpu_custom_call.1']
    #allocation5 [shape = 's32[2]{0}', space=sflag, size = 0x8, scoped, tag = 'scoped memory for tpu_custom_call.1']
    #allocation6 [shape = 'u8[65536]{0}', space=vmem, size = 0x10000, scoped, tag = 'input window, operand 1']
    #allocation7 [shape = 's32[2]{0}', space=sflag, size = 0x8, scoped, tag = 'scoped memory for tpu_custom_call.1']
    #allocation8 [shape = 'u8[65536]{0}', space=vmem, size = 0x10000, scoped, tag = 'input window, operand 2']
    #allocation9 [shape = 'u8[2048]{0}', space=vmem, size = 0x800, scoped, tag = 'output window, operand 0']
    %13 = vsyncpa [#allocation4], 0
    %s14 = scalar_lea.sflag [#allocation4], 1
    %15 = vsyncpa %s14, 0
    %16 = vsyncpa [#allocation7], 0
    %s17 = scalar_lea.sflag [#allocation7], 1
    %18 = vsyncpa %s17, 0
    %19 = vsyncpa [#allocation5], 0
    %s20 = scalar_lea.sflag [#allocation5], 1
    %21 = vsyncpa %s20, 0
    loop: start=0, step=1, limit=4
    $region2: #{tpu_custom_call.1} parent=1 // loop_pre_header
      _
    $region3: #{tpu_custom_call.1} parent=1 // loop_header
      %s23 = sphi 0, %s27
      %p24 = scmp.ge.s32.totalorder %s23, 4
      %s33 = sphi 0, %s35
      %s36 = sphi 0, %s33
      %s37 = sphi 0, %s36
      %s53 = sphi 0, %s37
      %s59 = sphi 0, %s61
      %s62 = sphi 0, %s59
      %s63 = sphi 0, %s62
      %s79 = sphi 0, %s63
      %s85 = sphi 0, %s87
      %s88 = sphi 0, %s85
      %s89 = sphi 0, %s88
      %s105 = sphi 0, %s89
      %s109 = sphi 0, %s109
      %s111 = sphi 0, %s109
      %s112 = sphi 0, %s111
      %s126 = sphi 0, %s112
      %s130 = sphi 0, %s130
      %s132 = sphi 0, %s130
      %s133 = sphi 0, %s132
      %s147 = sphi 0, %s133
      %s151 = sphi 0, %s151
      %s153 = sphi 0, %s151
      %s154 = sphi 0, %s153
      %s168 = sphi 0, %s154
      %s172 = sphi 0, %s172
      %s174 = sphi 0, %s172
      %s175 = sphi 0, %s174
      %s189 = sphi 0, %s175
      %s195 = sphi 0, %s197
      %s198 = sphi 0, %s195
      %s199 = sphi 0, %s198
      %s215 = sphi 0, %s199
    $region4: #{tpu_custom_call.1} parent=1 // loop_header_branch
      %26 = sbr.rel (%p24) target = $region8
    $region5: #{tpu_custom_call.1} parent=1 // loop_body
      %s28 = ssub.s32 %s23, 1
      %s29 = ssub.s32 %s23, 2
      %s30 = sadd.s32 %s23, 1
      %s31 = ssub.s32 %s23, %s30
      %p32 = scmp.eq.s32.totalorder %s31, 0
      %s34 = sadd.s32 %s33, 1
      %s35 = scalar_select %p32, %s33, %s34
      %p38 = pneg %p32
      %p39 = scmp.eq.s32.totalorder %s23, 1
      %p40 = por %p38, %p39
      %p41 = scmp.ne.s32.totalorder %s33, %s36
      %p42 = scmp.eq.s32.totalorder %s23, 0
      %p43 = por %p41, %p42
      %p44 = scmp.ne.s32.totalorder %s33, %s36
      %p45 = scmp.eq.s32.totalorder %s28, 1
      %p46 = por %p44, %p45
      %p47 = scmp.ne.s32.totalorder %s36, %s37
      %p48 = scmp.eq.s32.totalorder %s28, 0
      %p49 = por %p47, %p48
      %p50 = scmp.ne.s32.totalorder %s36, %s37
      %p51 = scmp.eq.s32.totalorder %s29, 1
      %p52 = por %p50, %p51
      %p54 = scmp.ne.s32.totalorder %s37, %s53
      %p55 = scmp.eq.s32.totalorder %s29, 0
      %p56 = por %p54, %p55
      %s57 = ssub.s32 %s23, %s30
      %p58 = scmp.eq.s32.totalorder %s57, 0
      %s60 = sadd.s32 %s59, 1
      %s61 = scalar_select %p58, %s59, %s60
      %p64 = pneg %p58
      %p65 = scmp.eq.s32.totalorder %s23, 1
      %p66 = por %p64, %p65
      %p67 = scmp.ne.s32.totalorder %s59, %s62
      %p68 = scmp.eq.s32.totalorder %s23, 0
      %p69 = por %p67, %p68
      %p70 = scmp.ne.s32.totalorder %s59, %s62
      %p71 = scmp.eq.s32.totalorder %s28, 1
      %p72 = por %p70, %p71
      %p73 = scmp.ne.s32.totalorder %s62, %s63
      %p74 = scmp.eq.s32.totalorder %s28, 0
      %p75 = por %p73, %p74
      %p76 = scmp.ne.s32.totalorder %s62, %s63
      %p77 = scmp.eq.s32.totalorder %s29, 1
      %p78 = por %p76, %p77
      %p80 = scmp.ne.s32.totalorder %s63, %s79
      %p81 = scmp.eq.s32.totalorder %s29, 0
      %p82 = por %p80, %p81
      %s83 = ssub.s32 %s23, %s30
      %p84 = scmp.eq.s32.totalorder %s83, 0
      %s86 = sadd.s32 %s85, 1
      %s87 = scalar_select %p84, %s85, %s86
      %p90 = pneg %p84
      %p91 = scmp.eq.s32.totalorder %s23, 1
      %p92 = por %p90, %p91
      %p93 = scmp.ne.s32.totalorder %s85, %s88
      %p94 = scmp.eq.s32.totalorder %s23, 0
      %p95 = por %p93, %p94
      %p96 = scmp.ne.s32.totalorder %s85, %s88
      %p97 = scmp.eq.s32.totalorder %s28, 1
      %p98 = por %p96, %p97
      %p99 = scmp.ne.s32.totalorder %s88, %s89
      %p100 = scmp.eq.s32.totalorder %s28, 0
      %p101 = por %p99, %p100
      %p102 = scmp.ne.s32.totalorder %s88, %s89
      %p103 = scmp.eq.s32.totalorder %s29, 1
      %p104 = por %p102, %p103
      %p106 = scmp.ne.s32.totalorder %s89, %s105
      %p107 = scmp.eq.s32.totalorder %s29, 0
      %p108 = por %p106, %p107
      %s110 = sadd.s32 %s109, 1
      %p113 = scmp.eq.s32.totalorder %s23, 1
      %p114 = scmp.ne.s32.totalorder %s109, %s111
      %p115 = scmp.eq.s32.totalorder %s23, 0
      %p116 = por %p114, %p115
      %p117 = scmp.ne.s32.totalorder %s109, %s111
      %p118 = scmp.eq.s32.totalorder %s28, 1
      %p119 = por %p117, %p118
      %p120 = scmp.ne.s32.totalorder %s111, %s112
      %p121 = scmp.eq.s32.totalorder %s28, 0
      %p122 = por %p120, %p121
      %p123 = scmp.ne.s32.totalorder %s111, %s112
      %p124 = scmp.eq.s32.totalorder %s29, 1
      %p125 = por %p123, %p124
      %p127 = scmp.ne.s32.totalorder %s112, %s126
      %p128 = scmp.eq.s32.totalorder %s29, 0
      %p129 = por %p127, %p128
      %s131 = sadd.s32 %s130, 1
      %p134 = scmp.eq.s32.totalorder %s23, 1
      %p135 = scmp.ne.s32.totalorder %s130, %s132
      %p136 = scmp.eq.s32.totalorder %s23, 0
      %p137 = por %p135, %p136
      %p138 = scmp.ne.s32.totalorder %s130, %s132
      %p139 = scmp.eq.s32.totalorder %s28, 1
      %p140 = por %p138, %p139
      %p141 = scmp.ne.s32.totalorder %s132, %s133
      %p142 = scmp.eq.s32.totalorder %s28, 0
      %p143 = por %p141, %p142
      %p144 = scmp.ne.s32.totalorder %s132, %s133
      %p145 = scmp.eq.s32.totalorder %s29, 1
      %p146 = por %p144, %p145
      %p148 = scmp.ne.s32.totalorder %s133, %s147
      %p149 = scmp.eq.s32.totalorder %s29, 0
      %p150 = por %p148, %p149
      %s152 = sadd.s32 %s151, 1
      %p155 = scmp.eq.s32.totalorder %s23, 1
      %p156 = scmp.ne.s32.totalorder %s151, %s153
      %p157 = scmp.eq.s32.totalorder %s23, 0
      %p158 = por %p156, %p157
      %p159 = scmp.ne.s32.totalorder %s151, %s153
      %p160 = scmp.eq.s32.totalorder %s28, 1
      %p161 = por %p159, %p160
      %p162 = scmp.ne.s32.totalorder %s153, %s154
      %p163 = scmp.eq.s32.totalorder %s28, 0
      %p164 = por %p162, %p163
      %p165 = scmp.ne.s32.totalorder %s153, %s154
      %p166 = scmp.eq.s32.totalorder %s29, 1
      %p167 = por %p165, %p166
      %p169 = scmp.ne.s32.totalorder %s154, %s168
      %p170 = scmp.eq.s32.totalorder %s29, 0
      %p171 = por %p169, %p170
      %s173 = sadd.s32 %s172, 1
      %p176 = scmp.eq.s32.totalorder %s23, 1
      %p177 = scmp.ne.s32.totalorder %s172, %s174
      %p178 = scmp.eq.s32.totalorder %s23, 0
      %p179 = por %p177, %p178
      %p180 = scmp.ne.s32.totalorder %s172, %s174
      %p181 = scmp.eq.s32.totalorder %s28, 1
      %p182 = por %p180, %p181
      %p183 = scmp.ne.s32.totalorder %s174, %s175
      %p184 = scmp.eq.s32.totalorder %s28, 0
      %p185 = por %p183, %p184
      %p186 = scmp.ne.s32.totalorder %s174, %s175
      %p187 = scmp.eq.s32.totalorder %s29, 1
      %p188 = por %p186, %p187
      %p190 = scmp.ne.s32.totalorder %s175, %s189
      %p191 = scmp.eq.s32.totalorder %s29, 0
      %p192 = por %p190, %p191
      %s193 = ssub.s32 %s23, %s30
      %p194 = scmp.eq.s32.totalorder %s193, 0
      %s196 = sadd.s32 %s195, 1
      %s197 = scalar_select %p194, %s195, %s196
      %p200 = pneg %p194
      %p201 = scmp.eq.s32.totalorder %s23, 1
      %p202 = por %p200, %p201
      %p203 = scmp.ne.s32.totalorder %s195, %s198
      %p204 = scmp.eq.s32.totalorder %s23, 0
      %p205 = por %p203, %p204
      %p206 = scmp.ne.s32.totalorder %s195, %s198
      %p207 = scmp.eq.s32.totalorder %s28, 1
      %p208 = por %p206, %p207
      %p209 = scmp.ne.s32.totalorder %s198, %s199
      %p210 = scmp.eq.s32.totalorder %s28, 0
      %p211 = por %p209, %p210
      %p212 = scmp.ne.s32.totalorder %s198, %s199
      %p213 = scmp.eq.s32.totalorder %s29, 1
      %p214 = por %p212, %p213
      %p216 = scmp.ne.s32.totalorder %s199, %s215
      %p217 = scmp.eq.s32.totalorder %s29, 0
      %p218 = por %p216, %p217
      %p219 = scmp.le.s32.totalorder 1, %s23
      %p220 = scmp.lt.s32.totalorder %s23, 3
      %p221 = pnand %p219, %p220
      %p222 = pneg %p221
      // Predicated region
      $region9: #{tpu_custom_call.1} parent=5 // pred_check
        _
      $region10: #{tpu_custom_call.1} parent=5 // pred_check_branch
        %224 = sbr.rel (%p221) target = $region12
      $region11: #{tpu_custom_call.1} parent=5 // pred_region
        %s225 = ssub.s32 %s23, 1
        // Predicated region
        $region13: #{tpu_custom_call.1} parent=11 // pred_check
          %p226 = pneg %p122
        $region14: #{tpu_custom_call.1} parent=11 // pred_check_branch
          %228 = sbr.rel (%p226) target = $region16
        $region15: #{tpu_custom_call.1} parent=11 // pred_region
          _
        $region16: #{tpu_custom_call.1} parent=11 // pred_fallthru
          _
        // Predicated region
        $region17: #{tpu_custom_call.1} parent=11 // pred_check
          %p229 = pneg %p143
        $region18: #{tpu_custom_call.1} parent=11 // pred_check_branch
          %231 = sbr.rel (%p229) target = $region20
        $region19: #{tpu_custom_call.1} parent=11 // pred_region
          _
        $region20: #{tpu_custom_call.1} parent=11 // pred_fallthru
          _
        // Predicated region
        $region21: #{tpu_custom_call.1} parent=11 // pred_check
          %p232 = pneg %p164
        $region22: #{tpu_custom_call.1} parent=11 // pred_check_branch
          %234 = sbr.rel (%p232) target = $region24
        $region23: #{tpu_custom_call.1} parent=11 // pred_region
          _
        $region24: #{tpu_custom_call.1} parent=11 // pred_fallthru
          _
        // Predicated region
        $region25: #{tpu_custom_call.1} parent=11 // pred_check
          %p235 = pneg %p185
        $region26: #{tpu_custom_call.1} parent=11 // pred_check_branch
          %237 = sbr.rel (%p235) target = $region28
        $region27: #{tpu_custom_call.1} parent=11 // pred_region
          _
        $region28: #{tpu_custom_call.1} parent=11 // pred_fallthru
          _
      $region12: #{tpu_custom_call.1} parent=5 // pred_fallthru
        _
      %p238 = scmp.lt.s32.totalorder %s23, 2
      // Predicated region
      $region29: #{tpu_custom_call.1} parent=5 // pred_check
        %p239 = pneg %p238
      $region30: #{tpu_custom_call.1} parent=5 // pred_check_branch
        %241 = sbr.rel (%p239) target = $region32
      $region31: #{tpu_custom_call.1} parent=5 // pred_region
        // Predicated region
        $region33: #{tpu_custom_call.1} parent=31 // pred_check
          %p242 = pneg %p43
        $region34: #{tpu_custom_call.1} parent=31 // pred_check_branch
          %244 = sbr.rel (%p242) target = $region36
        $region35: #{tpu_custom_call.1} parent=31 // pred_region
          %s245 = sand.u32 %s33, 1
          %s246 = scalar_lea.sflag [#allocation4], %s245
          %s247 = sand.u32 %s33, 1
          %s248 = smul.addr %s247, 64
          %s249 = scalar_lea.vmem [#allocation3], %s248
          %s251 = ssub.s32 1024, 1024
          %252 = vsyncadd %s246, %s251
          %s253 = smul.addr %s23, 8
          %s254 = smul.addr %s253, 128
          %s255 = scalar_lea.hbm %s0, %s254
          %s256 = sshll.u32 %s249, 4
          %s257 = int_to_ptr.vmem [resolvable:$true] %s256
          %262 = dma.hbm_to_vmem [thread:$0]  %s255, 1024, %s257, %s246, 256, 256, 16
        $region36: #{tpu_custom_call.1} parent=31 // pred_fallthru
          _
        // Predicated region
        $region37: #{tpu_custom_call.1} parent=31 // pred_check
          %p263 = pneg %p69
        $region38: #{tpu_custom_call.1} parent=31 // pred_check_branch
          %265 = sbr.rel (%p263) target = $region40
        $region39: #{tpu_custom_call.1} parent=31 // pred_region
          %s266 = sand.u32 %s23, 1
          %s267 = scalar_lea.sflag [#allocation7], %s266
          %s268 = sand.u32 %s59, 1
          %s269 = smul.addr %s268, 64
          %s270 = scalar_lea.vmem [#allocation6], %s269
          %s272 = ssub.s32 1024, 1024
          %273 = vsyncadd %s267, %s272
          %s274 = smul.addr %s23, 8
          %s275 = smul.addr %s274, 128
          %s276 = scalar_lea.hbm %s1, %s275
          %s277 = sshll.u32 %s270, 4
          %s278 = int_to_ptr.vmem [resolvable:$true] %s277
          %283 = dma.hbm_to_vmem [thread:$0]  %s276, 1024, %s278, %s267, 256, 256, 16
        $region40: #{tpu_custom_call.1} parent=31 // pred_fallthru
          _
        // Predicated region
        $region41: #{tpu_custom_call.1} parent=31 // pred_check
          %p284 = pneg %p95
        $region42: #{tpu_custom_call.1} parent=31 // pred_check_branch
          %286 = sbr.rel (%p284) target = $region44
        $region43: #{tpu_custom_call.1} parent=31 // pred_region
          %s287 = sand.u32 %s23, 1
          %s288 = scalar_lea.sflag [#allocation7], %s287
          %s289 = sand.u32 %s85, 1
          %s290 = smul.addr %s289, 64
          %s291 = scalar_lea.vmem [#allocation8], %s290
          %s293 = ssub.s32 1024, 1024
          %294 = vsyncadd %s288, %s293
          %s295 = smul.addr %s23, 8
          %s296 = smul.addr %s295, 128
          %s297 = scalar_lea.hbm %s2, %s296
          %s298 = sshll.u32 %s291, 4
          %s299 = int_to_ptr.vmem [resolvable:$true] %s298
          %304 = dma.hbm_to_vmem [thread:$0]  %s297, 1024, %s299, %s288, 256, 256, 16
        $region44: #{tpu_custom_call.1} parent=31 // pred_fallthru
          _
      $region32: #{tpu_custom_call.1} parent=5 // pred_fallthru
        _
      %p305 = scmp.le.s32.totalorder 1, %s23
      %p306 = scmp.lt.s32.totalorder %s23, 3
      %p307 = pnand %p305, %p306
      %p308 = pneg %p307
      // Predicated region
      $region45: #{tpu_custom_call.1} parent=5 // pred_check
        _
      $region46: #{tpu_custom_call.1} parent=5 // pred_check_branch
        %310 = sbr.rel (%p307) target = $region48
      $region47: #{tpu_custom_call.1} parent=5 // pred_region
        %s311 = ssub.s32 %s23, 1
        %s312 = sand.u32 %s36, 1
        %s313 = scalar_lea.sflag [#allocation4], %s312
        %s314 = sand.u32 %s36, 1
        %s315 = smul.addr %s314, 64
        %s316 = scalar_lea.vmem [#allocation3], %s315
        // Predicated region
        $region49: #{tpu_custom_call.1} parent=47 // pred_check
          %p317 = pneg %p49
        $region50: #{tpu_custom_call.1} parent=47 // pred_check_branch
          %319 = sbr.rel (%p317) target = $region52
        $region51: #{tpu_custom_call.1} parent=47 // pred_region
          %320 = dma.done %s313, 1024
        $region52: #{tpu_custom_call.1} parent=47 // pred_fallthru
          _
        %s321 = sand.u32 %s28, 1
        %s322 = scalar_lea.sflag [#allocation7], %s321
        %s323 = sand.u32 %s62, 1
        %s324 = smul.addr %s323, 64
        %s325 = scalar_lea.vmem [#allocation6], %s324
        // Predicated region
        $region53: #{tpu_custom_call.1} parent=47 // pred_check
          %p326 = pneg %p75
        $region54: #{tpu_custom_call.1} parent=47 // pred_check_branch
          %328 = sbr.rel (%p326) target = $region56
        $region55: #{tpu_custom_call.1} parent=47 // pred_region
          %329 = dma.done %s322, 1024
        $region56: #{tpu_custom_call.1} parent=47 // pred_fallthru
          _
        %s330 = sand.u32 %s28, 1
        %s331 = scalar_lea.sflag [#allocation7], %s330
        %s332 = sand.u32 %s88, 1
        %s333 = smul.addr %s332, 64
        %s334 = scalar_lea.vmem [#allocation8], %s333
        // Predicated region
        $region57: #{tpu_custom_call.1} parent=47 // pred_check
          %p335 = pneg %p101
        $region58: #{tpu_custom_call.1} parent=47 // pred_check_branch
          %337 = sbr.rel (%p335) target = $region60
        $region59: #{tpu_custom_call.1} parent=47 // pred_region
          %338 = dma.done %s331, 1024
        $region60: #{tpu_custom_call.1} parent=47 // pred_fallthru
          _
        %s339 = sand.u32 %s36, 1
        %s340 = scalar_lea.sflag [#allocation4], %s339
        %s341 = sand.u32 %s36, 1
        %s342 = smul.addr %s341, 64
        %s343 = scalar_lea.vmem [#allocation3], %s342
        %p344 = pneg %p49
        %p345 = pneg %p46
        %s346 = sand.u32 %s28, 1
        %s347 = scalar_lea.sflag [#allocation7], %s346
        %s348 = sand.u32 %s62, 1
        %s349 = smul.addr %s348, 64
        %s350 = scalar_lea.vmem [#allocation6], %s349
        %p351 = pneg %p75
        %p352 = pneg %p72
        %s353 = sand.u32 %s28, 1
        %s354 = scalar_lea.sflag [#allocation7], %s353
        %s355 = sand.u32 %s88, 1
        %s356 = smul.addr %s355, 64
        %s357 = scalar_lea.vmem [#allocation8], %s356
        %p358 = pneg %p101
        %p359 = pneg %p98
        %p360 = pneg %p122
        %p361 = pneg %p119
        %p362 = pneg %p143
        %p363 = pneg %p140
        %p364 = pneg %p164
        %p365 = pneg %p161
        %p366 = pneg %p185
        %p367 = pneg %p182
        %p368 = pneg %p211
        %p369 = pneg %p208
        %s370 = sand.u32 %s198, 1
        %s371 = scalar_lea.sflag [#allocation5], %s370
        %s372 = sand.u32 %s198, 1
        %s373 = smul.addr %s372, 2
        %s374 = scalar_lea.vmem [#allocation9], %s373
        %v375 = vld [vmem:[%s3] sm:$0xf]
        %v376 = vld [vmem:[%s4] sm:$0xf]
        %v377 = vld [vmem:[%s5] sm:$0xf]
        %s378 = sld [smem:[#allocation2]]
        %v379 = vld [vmem:[%s316] sm:$0xff]
        %v380 = vld [vmem:[%s316 + $0x8] sm:$0xff]
        %v381 = vld [vmem:[%s316 + $0x10] sm:$0xff]
        %v382 = vld [vmem:[%s316 + $0x18] sm:$0xff]
        %v383 = vld [vmem:[%s316 + $0x20] sm:$0xff]
        %v384 = vld [vmem:[%s316 + $0x28] sm:$0xff]
        %v385 = vld [vmem:[%s316 + $0x30] sm:$0xff]
        %v386 = vld [vmem:[%s316 + $0x38] sm:$0xff]
        %v387 = vld [vmem:[%s325] sm:$0xff]
        %v388 = vld [vmem:[%s325 + $0x8] sm:$0xff]
        %v389 = vld [vmem:[%s325 + $0x10] sm:$0xff]
        %v390 = vld [vmem:[%s325 + $0x18] sm:$0xff]
        %v391 = vld [vmem:[%s325 + $0x20] sm:$0xff]
        %v392 = vld [vmem:[%s325 + $0x28] sm:$0xff]
        %v393 = vld [vmem:[%s325 + $0x30] sm:$0xff]
        %v394 = vld [vmem:[%s325 + $0x38] sm:$0xff]
        %v395 = vld [vmem:[%s334] sm:$0xff]
        %v396 = vld [vmem:[%s334 + $0x8] sm:$0xff]
        %v397 = vld [vmem:[%s334 + $0x10] sm:$0xff]
        %v398 = vld [vmem:[%s334 + $0x18] sm:$0xff]
        %v399 = vld [vmem:[%s334 + $0x20] sm:$0xff]
        %v400 = vld [vmem:[%s334 + $0x28] sm:$0xff]
        %v401 = vld [vmem:[%s334 + $0x30] sm:$0xff]
        %v402 = vld [vmem:[%s334 + $0x38] sm:$0xff]
        %404 = vset.pattern.permute.xlu0 0
        %405 = vperm.xlu0 %404, %v376
        %v406 = vpop.permute.xlu0 %405
        %vm408 = vcmask 261120
        %v410 = vsel %vm408, %v375, 0
        %412 = vmatprep.subr.mxu0 0.0
        %413 = vmatpush1.msra.mxu0 0.0
        %414 = vmatprep.subr.mxu0 0.0
        %415 = vmatpush1.msra.mxu0 0.0
        %416 = vmatprep.subr.mxu0 0.0
        %417 = vmatpush1.msra.mxu0 0.0
        %418 = vmatprep.subr.mxu0 0.0
        %419 = vmatpush1.msra.mxu0 0.0
        %420 = vmatprep.subr.mxu0 0.0
        %421 = vmatpush1.msra.mxu0 0.0
        %422 = vmatprep.subr.mxu0 0.0
        %423 = vmatpush1.msra.mxu0 0.0
        %424 = vmatprep.subr.mxu0 0.0
        %425 = vmatpush1.msra.mxu0 0.0
        %426 = vmatprep.subr.mxu0 0.0
        %427 = vmatpush1.msra.mxu0 0.0
        %428 = vmatprep.subr.mxu0 0.0
        %429 = vmatpush1.msra.mxu0 0.0
        %430 = vmatprep.subr.mxu0 0.0
        %431 = vmatpush1.msra.mxu0 0.0
        %432 = vmatprep.subr.mxu0 0.0
        %433 = vmatpush1.msra.mxu0 0.0
        %434 = vmatprep.subr.mxu0 0.0
        %435 = vmatpush1.msra.mxu0 0.0
        %436 = vmatprep.subr.mxu0 %v386
        %437 = vmatpush1.msra.mxu0 %v385
        %438 = vmatprep.subr.mxu0 %v384
        %439 = vmatpush1.msra.mxu0 %v383
        %440 = vmatprep.subr.mxu0 %v382
        %441 = vmatpush1.msra.mxu0 %v381
        %442 = vmatprep.subr.mxu0 %v380
        %443 = vmatpush1.msra.mxu0 %v379
        %444 = vmatprep.subr.mxu0 0.0
        %445 = vmatpush2.msra.mxu0 0.0
        %446 = vmatprep.subr.mxu0 0.0
        %447 = vmatpush2.msra.mxu0 0.0
        %448 = vmatprep.subr.mxu0 0.0
        %449 = vmatpush2.msra.mxu0 0.0
        %450 = vmatprep.subr.mxu0 0.0
        %451 = vmatpush2.msra.mxu0 0.0
        %452 = vmatprep.subr.mxu0 0.0
        %453 = vmatpush2.msra.mxu0 0.0
        %454 = vmatprep.subr.mxu0 0.0
        %455 = vmatpush2.msra.mxu0 0.0
        %456 = vmatprep.subr.mxu0 0.0
        %457 = vmatpush2.msra.mxu0 0.0
        %458 = vmatprep.subr.mxu0 0.0
        %459 = vmatpush2.msra.mxu0 0.0
        %460 = vmatprep.subr.mxu0 0.0
        %461 = vmatpush2.msra.mxu0 0.0
        %462 = vmatprep.subr.mxu0 0.0
        %463 = vmatpush2.msra.mxu0 0.0
        %464 = vmatprep.subr.mxu0 0.0
        %465 = vmatpush2.msra.mxu0 0.0
        %466 = vmatprep.subr.mxu0 0.0
        %467 = vmatpush2.msra.mxu0 0.0
        %468 = vmatprep.subr.mxu0 0.0
        %469 = vmatpush2.msra.mxu0 0.0
        %470 = vmatprep.subr.mxu0 0.0
        %471 = vmatpush2.msra.mxu0 0.0
        %472 = vmatprep.subr.mxu0 0.0
        %473 = vmatpush2.msra.mxu0 0.0
        %474 = vmatprep.subr.mxu0 0.0
        %475 = vmatpush2.msra.mxu0 0.0
        %476 = vmatprep.mubr.f32.mxu0 0.0
        %477 = vmatmul.mubr.f32.gmra.mxu0 %v410
        %v478 = vpop.f32.mrf.mxu0
        %v479 = vadd.f32 %v406, %v478
        %v480 = vpop.f32.mrf.mxu0
        %v481 = vadd.f32 %v406, %v480
        %482 = vdwg.mxu0
        %483 = vmatprep.subr.mxu0 0.0
        %484 = vmatpush1.msra.mxu0 0.0
        %485 = vmatprep.subr.mxu0 0.0
        %486 = vmatpush1.msra.mxu0 0.0
        %487 = vmatprep.subr.mxu0 0.0
        %488 = vmatpush1.msra.mxu0 0.0
        %489 = vmatprep.subr.mxu0 0.0
        %490 = vmatpush1.msra.mxu0 0.0
        %491 = vmatprep.subr.mxu0 0.0
        %492 = vmatpush1.msra.mxu0 0.0
        %493 = vmatprep.subr.mxu0 0.0
        %494 = vmatpush1.msra.mxu0 0.0
        %495 = vmatprep.subr.mxu0 0.0
        %496 = vmatpush1.msra.mxu0 0.0
        %497 = vmatprep.subr.mxu0 0.0
        %498 = vmatpush1.msra.mxu0 0.0
        %499 = vmatprep.subr.mxu0 0.0
        %500 = vmatpush1.msra.mxu0 0.0
        %501 = vmatprep.subr.mxu0 0.0
        %502 = vmatpush1.msra.mxu0 0.0
        %503 = vmatprep.subr.mxu0 0.0
        %504 = vmatpush1.msra.mxu0 0.0
        %505 = vmatprep.subr.mxu0 0.0
        %506 = vmatpush1.msra.mxu0 0.0
        %507 = vmatprep.subr.mxu0 %v394
        %508 = vmatpush1.msra.mxu0 %v393
        %509 = vmatprep.subr.mxu0 %v392
        %510 = vmatpush1.msra.mxu0 %v391
        %511 = vmatprep.subr.mxu0 %v390
        %512 = vmatpush1.msra.mxu0 %v389
        %513 = vmatprep.subr.mxu0 %v388
        %514 = vmatpush1.msra.mxu0 %v387
        %515 = vmatprep.subr.mxu0 0.0
        %516 = vmatpush2.msra.mxu0 0.0
        %517 = vmatprep.subr.mxu0 0.0
        %518 = vmatpush2.msra.mxu0 0.0
        %519 = vmatprep.subr.mxu0 0.0
        %520 = vmatpush2.msra.mxu0 0.0
        %521 = vmatprep.subr.mxu0 0.0
        %522 = vmatpush2.msra.mxu0 0.0
        %523 = vmatprep.subr.mxu0 0.0
        %524 = vmatpush2.msra.mxu0 0.0
        %525 = vmatprep.subr.mxu0 0.0
        %526 = vmatpush2.msra.mxu0 0.0
        %527 = vmatprep.subr.mxu0 0.0
        %528 = vmatpush2.msra.mxu0 0.0
        %529 = vmatprep.subr.mxu0 0.0
        %530 = vmatpush2.msra.mxu0 0.0
        %531 = vmatprep.subr.mxu0 0.0
        %532 = vmatpush2.msra.mxu0 0.0
        %533 = vmatprep.subr.mxu0 0.0
        %534 = vmatpush2.msra.mxu0 0.0
        %535 = vmatprep.subr.mxu0 0.0
        %536 = vmatpush2.msra.mxu0 0.0
        %537 = vmatprep.subr.mxu0 0.0
        %538 = vmatpush2.msra.mxu0 0.0
        %539 = vmatprep.subr.mxu0 0.0
        %540 = vmatpush2.msra.mxu0 0.0
        %541 = vmatprep.subr.mxu0 0.0
        %542 = vmatpush2.msra.mxu0 0.0
        %543 = vmatprep.subr.mxu0 0.0
        %544 = vmatpush2.msra.mxu0 0.0
        %545 = vmatprep.subr.mxu0 0.0
        %546 = vmatpush2.msra.mxu0 0.0
        %547 = vmatprep.mubr.f32.mxu0 0.0
        %548 = vmatmul.mubr.f32.gmra.mxu0 %v410
        %v549 = vpop.f32.mrf.mxu0
        %v550 = vadd.f32 %v406, %v549
        %v551 = vpop.f32.mrf.mxu0
        %v552 = vadd.f32 %v406, %v551
        %553 = vdwg.mxu0
        %554 = vmatprep.subr.mxu0 0.0
        %555 = vmatpush1.msra.mxu0 0.0
        %556 = vmatprep.subr.mxu0 0.0
        %557 = vmatpush1.msra.mxu0 0.0
        %558 = vmatprep.subr.mxu0 0.0
        %559 = vmatpush1.msra.mxu0 0.0
        %560 = vmatprep.subr.mxu0 0.0
        %561 = vmatpush1.msra.mxu0 0.0
        %562 = vmatprep.subr.mxu0 0.0
        %563 = vmatpush1.msra.mxu0 0.0
        %564 = vmatprep.subr.mxu0 0.0
        %565 = vmatpush1.msra.mxu0 0.0
        %566 = vmatprep.subr.mxu0 0.0
        %567 = vmatpush1.msra.mxu0 0.0
        %568 = vmatprep.subr.mxu0 0.0
        %569 = vmatpush1.msra.mxu0 0.0
        %570 = vmatprep.subr.mxu0 0.0
        %571 = vmatpush1.msra.mxu0 0.0
        %572 = vmatprep.subr.mxu0 0.0
        %573 = vmatpush1.msra.mxu0 0.0
        %574 = vmatprep.subr.mxu0 0.0
        %575 = vmatpush1.msra.mxu0 0.0
        %576 = vmatprep.subr.mxu0 0.0
        %577 = vmatpush1.msra.mxu0 0.0
        %578 = vmatprep.subr.mxu0 %v402
        %579 = vmatpush1.msra.mxu0 %v401
        %580 = vmatprep.subr.mxu0 %v400
        %581 = vmatpush1.msra.mxu0 %v399
        %582 = vmatprep.subr.mxu0 %v398
        %583 = vmatpush1.msra.mxu0 %v397
        %584 = vmatprep.subr.mxu0 %v396
        %585 = vmatpush1.msra.mxu0 %v395
        %586 = vmatprep.subr.mxu0 0.0
        %587 = vmatpush2.msra.mxu0 0.0
        %588 = vmatprep.subr.mxu0 0.0
        %589 = vmatpush2.msra.mxu0 0.0
        %590 = vmatprep.subr.mxu0 0.0
        %591 = vmatpush2.msra.mxu0 0.0
        %592 = vmatprep.subr.mxu0 0.0
        %593 = vmatpush2.msra.mxu0 0.0
        %594 = vmatprep.subr.mxu0 0.0
        %595 = vmatpush2.msra.mxu0 0.0
        %596 = vmatprep.subr.mxu0 0.0
        %597 = vmatpush2.msra.mxu0 0.0
        %598 = vmatprep.subr.mxu0 0.0
        %599 = vmatpush2.msra.mxu0 0.0
        %600 = vmatprep.subr.mxu0 0.0
        %601 = vmatpush2.msra.mxu0 0.0
        %602 = vmatprep.subr.mxu0 0.0
        %603 = vmatpush2.msra.mxu0 0.0
        %604 = vmatprep.subr.mxu0 0.0
        %605 = vmatpush2.msra.mxu0 0.0
        %606 = vmatprep.subr.mxu0 0.0
        %607 = vmatpush2.msra.mxu0 0.0
        %608 = vmatprep.subr.mxu0 0.0
        %609 = vmatpush2.msra.mxu0 0.0
        %610 = vmatprep.subr.mxu0 0.0
        %611 = vmatpush2.msra.mxu0 0.0
        %612 = vmatprep.subr.mxu0 0.0
        %613 = vmatpush2.msra.mxu0 0.0
        %614 = vmatprep.subr.mxu0 0.0
        %615 = vmatpush2.msra.mxu0 0.0
        %616 = vmatprep.subr.mxu0 0.0
        %617 = vmatpush2.msra.mxu0 0.0
        %618 = vmatprep.mubr.f32.mxu0 0.0
        %619 = vmatmul.mubr.f32.gmra.mxu0 %v410
        %v620 = vpop.f32.mrf.mxu0
        %v621 = vadd.f32 %v406, %v620
        %v622 = vpop.f32.mrf.mxu0
        %v623 = vadd.f32 %v406, %v622
        %624 = vdwg.mxu0
        %v625 = vmax.f32 %v479, 0.0
        %v626 = vmax.f32 %v481, 0.0
        %v627 = vmax.f32 %v550, 0.0
        %v628 = vmax.f32 %v552, 0.0
        %v629 = vmax.f32 %v621, 0.0
        %v630 = vmax.f32 %v623, 0.0
        %632 = vset.pattern.permute.xlu0 0
        %633 = vperm.xlu0 %632, %v377
        %v634 = vpop.permute.xlu0 %633
        %v636 = vmul.f32 %v625, %v634
        %v637 = vmul.f32 %v626, %v634
        %v638 = vmul.f32 %v627, %v634
        %v639 = vmul.f32 %v628, %v634
        %v640 = vmul.f32 %v629, %v634
        %v641 = vmul.f32 %v630, %v634
        %vm642 = vcmask 1043456
        %v643 = vsel %vm642, %v636, 0.0
        %v644 = vrot.slane %v643, 4
        %v645 = vadd.f32 %v643, %v644
        %v646 = vrot.slane %v645, 2
        %v647 = vadd.f32 %v645, %v646
        %v648 = vrot.slane %v647, 1
        %v649 = vadd.f32 %v647, %v648
        %v650 = vsel %vm642, %v637, 0.0
        %v651 = vrot.slane %v650, 4
        %v652 = vadd.f32 %v650, %v651
        %v653 = vrot.slane %v652, 2
        %v654 = vadd.f32 %v652, %v653
        %v655 = vrot.slane %v654, 1
        %v656 = vadd.f32 %v654, %v655
        %v657 = vsel %vm642, %v638, 0.0
        %v658 = vrot.slane %v657, 4
        %v659 = vadd.f32 %v657, %v658
        %v660 = vrot.slane %v659, 2
        %v661 = vadd.f32 %v659, %v660
        %v662 = vrot.slane %v661, 1
        %v663 = vadd.f32 %v661, %v662
        %v664 = vsel %vm642, %v639, 0.0
        %v665 = vrot.slane %v664, 4
        %v666 = vadd.f32 %v664, %v665
        %v667 = vrot.slane %v666, 2
        %v668 = vadd.f32 %v666, %v667
        %v669 = vrot.slane %v668, 1
        %v670 = vadd.f32 %v668, %v669
        %v671 = vsel %vm642, %v640, 0.0
        %v672 = vrot.slane %v671, 4
        %v673 = vadd.f32 %v671, %v672
        %v674 = vrot.slane %v673, 2
        %v675 = vadd.f32 %v673, %v674
        %v676 = vrot.slane %v675, 1
        %v677 = vadd.f32 %v675, %v676
        %v678 = vsel %vm642, %v641, 0.0
        %v679 = vrot.slane %v678, 4
        %v680 = vadd.f32 %v678, %v679
        %v681 = vrot.slane %v680, 2
        %v682 = vadd.f32 %v680, %v681
        %v683 = vrot.slane %v682, 1
        %v684 = vadd.f32 %v682, %v683
        %v685 = vstv %s378
        %v686 = vadd.f32 %v649, %v685
        %v687 = vadd.f32 %v656, %v685
        %v688 = vadd.f32 %v663, %v685
        %v689 = vadd.f32 %v670, %v685
        %v690 = vadd.f32 %v677, %v685
        %v691 = vadd.f32 %v684, %v685
        %v692 = vxor.u32 %v686, 2147483648
        %v693 = vxor.u32 %v687, 2147483648
        %v694 = vxor.u32 %v688, 2147483648
        %v695 = vxor.u32 %v689, 2147483648
        %v696 = vxor.u32 %v690, 2147483648
        %v697 = vxor.u32 %v691, 2147483648
        %v698 = vmul.f32 %v692, 1.442695
        %v699 = vpow.pop %v698
        %v700 = vmul.f32 %v693, 1.442695
        %v701 = vpow.pop %v700
        %v702 = vmul.f32 %v694, 1.442695
        %v703 = vpow.pop %v702
        %v704 = vmul.f32 %v695, 1.442695
        %v705 = vpow.pop %v704
        %v706 = vmul.f32 %v696, 1.442695
        %v707 = vpow.pop %v706
        %v708 = vmul.f32 %v697, 1.442695
        %v709 = vpow.pop %v708
        %v710 = vadd.f32 %v699, 1.0
        %v711 = vadd.f32 %v701, 1.0
        %v712 = vadd.f32 %v703, 1.0
        %v713 = vadd.f32 %v705, 1.0
        %v714 = vadd.f32 %v707, 1.0
        %v715 = vadd.f32 %v709, 1.0
        %v716 = vrcp.pop %v710
        %v717 = vmul.f32 1.0, %v716
        %v718 = vrcp.pop %v711
        %v719 = vmul.f32 1.0, %v718
        %v720 = vrcp.pop %v712
        %v721 = vmul.f32 1.0, %v720
        %v722 = vrcp.pop %v713
        %v723 = vmul.f32 1.0, %v722
        %v724 = vrcp.pop %v714
        %v725 = vmul.f32 1.0, %v724
        %v726 = vrcp.pop %v715
        %v727 = vmul.f32 1.0, %v726
        %v728 = vmul.f32 %v717, %v721
        %v729 = vmul.f32 %v719, %v723
        %v730 = vmul.f32 %v728, %v725
        %v731 = vmul.f32 %v729, %v727
        %v734 = vcombine.low %v730, %v731
        %v736 = vunpack.c.l.s4 1966171168
        %v737 = vunpack.c.0.s8 %v736
        %v738 = vlaneseq
        %v739 = vshrl.u32 %v738, 7
        %v740 = vsub.s32 %v737, %v739
        %v741 = vrot.slane %v734, %v740
        %v743 = vunpack.c.l.s4 1966171168
        %v744 = vunpack.c.0.s8 %v743
        %v745 = vlaneseq
        %v746 = vshrl.u32 %v745, 7
        %v747 = vsub.s32 %v744, %v746
        %v748 = vrot.slane %v741, %v747
        %v750 = vlaneseq
        %vm751 = vcmp.ge.s32.totalorder %v750, 0
        %vm752 = vcmp.lt.s32.totalorder %v750, 256
        %vm753 = vmand %vm751, %vm752
        %754 = vst.msk [vmem:[%s374] sm:$0x3] %vm753, %v748
        %s755 = sand.u32 %s198, 1
        %s756 = scalar_lea.sflag [#allocation5], %s755
        %s757 = sand.u32 %s198, 1
        %s758 = smul.addr %s757, 2
        %s759 = scalar_lea.vmem [#allocation9], %s758
        // Predicated region
        $region61: #{tpu_custom_call.1} parent=47 // pred_check
          %p760 = pneg %p208
        $region62: #{tpu_custom_call.1} parent=47 // pred_check_branch
          %762 = sbr.rel (%p760) target = $region64
        $region63: #{tpu_custom_call.1} parent=47 // pred_region
          %s764 = ssub.s32 32, 32
          %765 = vsyncadd %s756, %s764
          %s766 = smul.addr %s28, 2
          %s767 = smul.addr %s766, 16
          %s768 = scalar_lea.hbm %s7, %s767
          %s770 = sshll.u32 %s759, 4
          %s771 = int_to_ptr.vmem [resolvable:$true] %s770
          %773 = dma.vmem_to_hbm [thread:$0]  %s771, 32, %s768, %s756
        $region64: #{tpu_custom_call.1} parent=47 // pred_fallthru
          _
      $region48: #{tpu_custom_call.1} parent=5 // pred_fallthru
        _
      %p774 = scmp.le.s32.totalorder 2, %s23
      // Predicated region
      $region65: #{tpu_custom_call.1} parent=5 // pred_check
        %p775 = pneg %p774
      $region66: #{tpu_custom_call.1} parent=5 // pred_check_branch
        %777 = sbr.rel (%p775) target = $region68
      $region67: #{tpu_custom_call.1} parent=5 // pred_region
        %s778 = ssub.s32 %s23, 2
        // Predicated region
        $region69: #{tpu_custom_call.1} parent=67 // pred_check
          %p779 = pneg %p214
        $region70: #{tpu_custom_call.1} parent=67 // pred_check_branch
          %781 = sbr.rel (%p779) target = $region72
        $region71: #{tpu_custom_call.1} parent=67 // pred_region
          %s782 = sand.u32 %s199, 1
          %s783 = scalar_lea.sflag [#allocation5], %s782
          %s784 = sand.u32 %s199, 1
          %s785 = smul.addr %s784, 2
          %s786 = scalar_lea.vmem [#allocation9], %s785
          %787 = dma.done %s783, 32
        $region72: #{tpu_custom_call.1} parent=67 // pred_fallthru
          _
      $region68: #{tpu_custom_call.1} parent=5 // pred_fallthru
        _
    $region6: #{tpu_custom_call.1} parent=1 // loop_footer
      %s27 = sadd.s32 1, %s23
    $region7: #{tpu_custom_call.1} parent=1 // loop_footer_branch
      %22 = sbr.rel target = $region3
    $region8: #{tpu_custom_call.1} parent=1 // loop_exit
      _
    %788 = vsyncpa [#allocation4], 1
    %s789 = scalar_lea.sflag [#allocation4], 1
    %790 = vsyncpa %s789, 1
    %791 = vsyncpa [#allocation7], 1
    %s792 = scalar_lea.sflag [#allocation7], 1
    %793 = vsyncpa %s792, 1
    %794 = vsyncpa [#allocation5], 1
    %s795 = scalar_lea.sflag [#allocation5], 1
    %796 = vsyncpa %s795, 1

</llo_original>
